<compile_context>
chip_gen: v7x
topology: tpu7x:2x2x1
jax: 0.10.0
libtpu: 0.0.40
codegen_flags: <defaults>
</compile_context>

<pallas_src>
import jax
import jax.numpy as jnp
from jax.experimental import pallas as pl
from jax.experimental.pallas import tpu as pltpu


def _round_up(n, m):
    return ((n + m - 1) // m) * m


def matrix_mapper_kernel(x_ref, w1_ref, b1_ref, w2k_ref, b2k_ref,
                         w2v_ref, b2v_ref, out_ref):
    # x_ref  : (TB, D)     f32
    # w1_ref : (D, 2*Hp)   bf16    b1_ref : (1, 2*Hp)  f32
    # w2k_ref: (Hp, KVp)   bf16    b2k_ref: (1, KVp)   f32
    # w2v_ref: (Hp, KVp)   bf16    b2v_ref: (1, KVp)   f32
    # out_ref: (TB, KVp)   lane-dense output slab
    w1 = w1_ref[...]
    x = x_ref[...].astype(w1.dtype)            # bf16 operands for the MXU

    # Fused layer 1 for both heads (shared x): one MXU matmul, f32 accumulate.
    h = jnp.dot(x, w1, preferred_element_type=jnp.float32) + b1_ref[...]
    h = jnp.maximum(h, 0.0).astype(w1.dtype)

    hp = w2k_ref.shape[0]                      # multiple of 128 -> free lane slices
    hk = h[:, :hp]
    hv = h[:, hp:]

    # Layer 2 with the outer-product expansion folded into the packed weights:
    #   kk[:, i*v+j] = k[b, i],  vv[:, i*v+j] = v[b, j]  ->  out = kk * vv
    kk = jnp.dot(hk, w2k_ref[...], preferred_element_type=jnp.float32) + b2k_ref[...]
    vv = jnp.dot(hv, w2v_ref[...], preferred_element_type=jnp.float32) + b2v_ref[...]
    out_ref[...] = (kk * vv).astype(out_ref.dtype)


def pack_params(p, *, mxu_dtype=jnp.bfloat16):
    """One-time weight packing for the kernel (do NOT call per forward pass)."""
    f32 = jnp.float32
    D, H = p["w1k"].shape
    k_dim = p["w2k"].shape[1]
    v_dim = p["w2v"].shape[1]
    Hp = _round_up(H, 128)        # exact: ReLU(0)=0 and zero layer-2 rows below
    KV = k_dim * v_dim
    KVp = _round_up(KV, 128)      # keep output stores / slice points lane-aligned

    def pad_cols(a, n):
        return jnp.pad(a, ((0, 0), (0, n - a.shape[1])))

    def pad_rows(a, n):
        return jnp.pad(a, ((0, n - a.shape[0]), (0, 0)))

    # Layer 1: fuse the two heads along the output dim (each padded to Hp).
    w1 = jnp.concatenate([pad_cols(p["w1k"], Hp), pad_cols(p["w1v"], Hp)], axis=1)
    b1 = jnp.concatenate([pad_cols(p["b1k"], Hp), pad_cols(p["b1v"], Hp)], axis=1)

    # Layer 2: fold the flattened outer product into the weights.
    #   repeat(k, v)[i*v+j] = k[i]  -> repeat columns of w2k v_dim times
    #   tile(v, k)[i*v+j]   = v[j]  -> tile columns of w2v k_dim times
    w2k = pad_rows(pad_cols(jnp.repeat(p["w2k"], v_dim, axis=1), KVp), Hp)
    b2k = pad_cols(jnp.repeat(p["b2k"], v_dim, axis=1), KVp)
    w2v = pad_rows(pad_cols(jnp.tile(p["w2v"], (1, k_dim)), KVp), Hp)
    b2v = pad_cols(jnp.tile(p["b2v"], (1, k_dim)), KVp)

    return dict(
        w1=w1.astype(mxu_dtype), b1=b1.astype(f32),
        w2k=w2k.astype(mxu_dtype), b2k=b2k.astype(f32),
        w2v=w2v.astype(mxu_dtype), b2v=b2v.astype(f32),
        dims=dict(D=D, H=H, Hp=Hp, k_dim=k_dim, v_dim=v_dim, KV=KV, KVp=KVp),
    )


def matrix_mapper(x, packed, *, batch_tile=512, out_dtype=jnp.float32,
                  flat_output=False, vmem_budget_bytes=48 << 20):
    """x: (B, input_dim) f32, packed: output of pack_params().

    Returns (B, k_dim, v_dim), or the lane-dense (B, k_dim*v_dim) slab when
    flat_output=True.  Pass out_dtype=jnp.bfloat16 to halve HBM write traffic
    if the consumer tolerates it (this kernel is memory-bound at realistic B).
    """
    dims = packed["dims"]
    D, Hp, KV, KVp = dims["D"], dims["Hp"], dims["KV"], dims["KVp"]
    k_dim, v_dim = dims["k_dim"], dims["v_dim"]
    B = x.shape[0]

    # ---- VMEM- and TensorCore-aware batch tile selection ----
    weight_bytes = sum(int(v.size) * v.dtype.itemsize
                       for k, v in packed.items() if k != "dims")
    out_itemsize = jnp.dtype(out_dtype).itemsize
    # per-row bytes: double-buffered x + out slabs, plus f32 intermediates (h, kk, vv)
    per_row = 2 * D * 4 + 2 * KVp * out_itemsize + 4 * (2 * Hp + 2 * KVp)
    avail = max(vmem_budget_bytes - 2 * weight_bytes, 1 << 20)
    tb_cap = max(16, (avail // per_row) // 16 * 16)
    # aim for >= 2 grid steps at large B so ("parallel",) uses both v7x TCs
    TB = max(16, min(batch_tile, tb_cap, _round_up(pl.cdiv(B, 2), 16)))

    Bp = _round_up(B, TB)
    if Bp != B:
        x = jnp.pad(x, ((0, Bp - B), (0, 0)))
    grid = (Bp // TB,)

    # Explicit scoped-VMEM limit: v5e defaults to 16 MiB (would reject big
    # tiles); keep <= 64 MiB so the value is also legal on v7x.
    vmem_limit = int(min(max(weight_bytes + TB * per_row + (4 << 20), 32 << 20),
                         64 << 20))

    operands = (x, packed["w1"], packed["b1"], packed["w2k"], packed["b2k"],
                packed["w2v"], packed["b2v"])

    def launch(weight_mode):
        def wspec(a):                       # constant index_map -> VMEM-resident
            return pl.BlockSpec(a.shape, lambda i: (0, 0),
                                pipeline_mode=weight_mode)
        return pl.pallas_call(
            matrix_mapper_kernel,
            out_shape=jax.ShapeDtypeStruct((Bp, KVp), out_dtype),
            grid=grid,
            in_specs=[
                pl.BlockSpec((TB, D), lambda i: (i, 0)),   # x: tiled over batch
                wspec(packed["w1"]), wspec(packed["b1"]),
                wspec(packed["w2k"]), wspec(packed["b2k"]),
                wspec(packed["w2v"]), wspec(packed["b2v"]),
            ],
            out_specs=pl.BlockSpec((TB, KVp), lambda i: (i, 0)),
            compiler_params=pltpu.CompilerParams(
                dimension_semantics=("parallel",),
                vmem_limit_bytes=vmem_limit),
        )(*operands)

    try:
        # Single-buffer the constant-index weights (fetched once; the second
        # pipeline buffer is pure wasted VMEM — matters most on v7x's 64 MiB).
        out2d = launch(pl.Buffered(1))
    except Exception:
        out2d = launch(None)   # fallback for Pallas builds without pipeline_mode

    out2d = out2d[:B, :KV]
    if flat_output:
        return out2d           # lane-dense 2-D layout; preferred downstream
    # NOTE: reshaping to a v_dim-lane minor dim may force an XLA relayout copy;
    # use flat_output=True when the consumer can take the flattened layout.
    return out2d.reshape(B, k_dim, v_dim)


def init_params(key, input_dim, hidden_dim, k_dim, v_dim):
    """Deterministic synthetic parameters (uniform, PyTorch-Linear-style bounds)."""
    ks = jax.random.split(key, 8)

    def lin(kw, kb, fan_in, fan_out):
        bound = 1.0 / jnp.sqrt(fan_in)
        w = jax.random.uniform(kw, (fan_in, fan_out), jnp.float32, -bound, bound)
        b = jax.random.uniform(kb, (1, fan_out), jnp.float32, -bound, bound)
        return w, b

    w1k, b1k = lin(ks[0], ks[1], input_dim, hidden_dim)
    w2k, b2k = lin(ks[2], ks[3], hidden_dim, k_dim)
    w1v, b1v = lin(ks[4], ks[5], input_dim, hidden_dim)
    w2v, b2v = lin(ks[6], ks[7], hidden_dim, v_dim)
    return dict(w1k=w1k, b1k=b1k, w2k=w2k, b2k=b2k,
                w1v=w1v, b1v=b1v, w2v=w2v, b2v=b2v)


def reference(x, p, mxu_dtype=None):
    """Pure-JAX reference. mxu_dtype=bf16 emulates the kernel's MXU precision."""
    f32 = jnp.float32
    cast = (lambda a: a.astype(mxu_dtype)) if mxu_dtype is not None else (lambda a: a)
    hk = jnp.maximum(jnp.dot(cast(x), cast(p["w1k"]),
                             preferred_element_type=f32) + p["b1k"], 0.0)
    hv = jnp.maximum(jnp.dot(cast(x), cast(p["w1v"]),
                             preferred_element_type=f32) + p["b1v"], 0.0)
    k = jnp.dot(cast(hk), cast(p["w2k"]), preferred_element_type=f32) + p["b2k"]
    v = jnp.dot(cast(hv), cast(p["w2v"]), preferred_element_type=f32) + p["b2v"]
    return k[:, :, None] * v[:, None, :]


if __name__ == "__main__":
    B, INPUT_DIM, HIDDEN_DIM, K_DIM, V_DIM = 2, 32, 32, 16, 16

    key = jax.random.PRNGKey(0)
    kx, kp = jax.random.split(key)
    x = jax.random.normal(kx, (B, INPUT_DIM), jnp.float32)
    params = init_params(kp, INPUT_DIM, HIDDEN_DIM, K_DIM, V_DIM)

    packed = pack_params(params)      # one-time packing, outside the hot path
    out = jax.block_until_ready(matrix_mapper(x, packed))

    assert out.shape == (B, K_DIM, V_DIM)

    # Tight check vs. a reference that mirrors the kernel's bf16-operand /
    # f32-accumulate MXU precision.
    ref_prec = reference(x, params, mxu_dtype=jnp.bfloat16)
    err_prec = float(jnp.max(jnp.abs(out - ref_prec)))
    assert err_prec < 5e-3, ("precision-matched mismatch", err_prec)

    # Loose check vs. the plain f32 semantics of the PyTorch module (bf16 MXU
    # operands -> loosened tolerance, per review).
    ref_f32 = reference(x, params)
    err_sem = float(jnp.max(jnp.abs(out - ref_f32)))
    assert err_sem < 5e-2, ("semantic mismatch", err_sem)

    print("KERNEL_OK")
</pallas_src>

<mosaic_0001>
module attributes {stable_mosaic.version = 11 : i64} {
  func.func @matrix_mapper_kernel(%arg0: i32, %arg1: memref<16x32xf32, #tpu.memory_space<vmem>>, %arg2: memref<32x256xbf16, #tpu.memory_space<vmem>>, %arg3: memref<1x256xf32, #tpu.memory_space<vmem>>, %arg4: memref<128x256xbf16, #tpu.memory_space<vmem>>, %arg5: memref<1x256xf32, #tpu.memory_space<vmem>>, %arg6: memref<128x256xbf16, #tpu.memory_space<vmem>>, %arg7: memref<1x256xf32, #tpu.memory_space<vmem>>, %arg8: memref<16x256xf32, #tpu.memory_space<vmem>>) attributes {dimension_semantics = [#tpu.dimension_semantics<parallel>], iteration_bounds = array<i64: 1>, scalar_prefetch = 0 : i64, scratch_operands = 0 : i64, tpu.core_type = #tpu.core_type<tc>, window_params = [{transform_indices = @transform_0, window_bounds = array<i64: 16, 32>}, {pipeline_mode = #tpu.pipeline_mode<synchronous>, transform_indices = @transform_1, window_bounds = array<i64: 32, 256>}, {pipeline_mode = #tpu.pipeline_mode<synchronous>, transform_indices = @transform_2, window_bounds = array<i64: 1, 256>}, {pipeline_mode = #tpu.pipeline_mode<synchronous>, transform_indices = @transform_3, window_bounds = array<i64: 128, 256>}, {pipeline_mode = #tpu.pipeline_mode<synchronous>, transform_indices = @transform_4, window_bounds = array<i64: 1, 256>}, {pipeline_mode = #tpu.pipeline_mode<synchronous>, transform_indices = @transform_5, window_bounds = array<i64: 128, 256>}, {pipeline_mode = #tpu.pipeline_mode<synchronous>, transform_indices = @transform_6, window_bounds = array<i64: 1, 256>}, {transform_indices = @transform_7, window_bounds = array<i64: 16, 256>}]} {
    %c0 = arith.constant 0 : index
    %c0_0 = arith.constant 0 : index
    %0 = vector.load %arg2[%c0, %c0_0] : memref<32x256xbf16, #tpu.memory_space<vmem>>, vector<32x256xbf16>
    %c0_1 = arith.constant 0 : index
    %c0_2 = arith.constant 0 : index
    %1 = vector.load %arg1[%c0_1, %c0_2] : memref<16x32xf32, #tpu.memory_space<vmem>>, vector<16x32xf32>
    %2 = arith.truncf %1 : vector<16x32xf32> to vector<16x32xbf16>
    %cst = arith.constant dense<0.000000e+00> : vector<16x256xf32>
    %3 = tpu.matmul %2, %0, %cst {dimension_numbers = #tpu.dot_dimension_numbers<[1], [0], [0], [1], [0, 0, 1, 1], [], []>} : vector<16x32xbf16>, vector<32x256xbf16>, vector<16x256xf32> -> vector<16x256xf32>
    %c0_3 = arith.constant 0 : index
    %c0_4 = arith.constant 0 : index
    %4 = vector.load %arg3[%c0_3, %c0_4] : memref<1x256xf32, #tpu.memory_space<vmem>>, vector<1x256xf32>
    %5 = vector.broadcast %4 : vector<1x256xf32> to vector<16x256xf32>
    %6 = arith.addf %3, %5 : vector<16x256xf32>
    %cst_5 = arith.constant 0.000000e+00 : f32
    %7 = vector.broadcast %cst_5 : f32 to vector<16x256xf32>
    %8 = arith.maximumf %6, %7 : vector<16x256xf32>
    %9 = arith.truncf %8 : vector<16x256xf32> to vector<16x256xbf16>
    %10 = vector.extract_strided_slice %9 {offsets = [0, 0], sizes = [16, 128], strides = [1, 1]} : vector<16x256xbf16> to vector<16x128xbf16>
    %11 = vector.extract_strided_slice %9 {offsets = [0, 128], sizes = [16, 128], strides = [1, 1]} : vector<16x256xbf16> to vector<16x128xbf16>
    %c0_6 = arith.constant 0 : index
    %c0_7 = arith.constant 0 : index
    %12 = vector.load %arg4[%c0_6, %c0_7] : memref<128x256xbf16, #tpu.memory_space<vmem>>, vector<128x256xbf16>
    %cst_8 = arith.constant dense<0.000000e+00> : vector<16x256xf32>
    %13 = tpu.matmul %10, %12, %cst_8 {dimension_numbers = #tpu.dot_dimension_numbers<[1], [0], [0], [1], [0, 0, 1, 1], [], []>} : vector<16x128xbf16>, vector<128x256xbf16>, vector<16x256xf32> -> vector<16x256xf32>
    %c0_9 = arith.constant 0 : index
    %c0_10 = arith.constant 0 : index
    %14 = vector.load %arg5[%c0_9, %c0_10] : memref<1x256xf32, #tpu.memory_space<vmem>>, vector<1x256xf32>
    %15 = vector.broadcast %14 : vector<1x256xf32> to vector<16x256xf32>
    %16 = arith.addf %13, %15 : vector<16x256xf32>
    %c0_11 = arith.constant 0 : index
    %c0_12 = arith.constant 0 : index
    %17 = vector.load %arg6[%c0_11, %c0_12] : memref<128x256xbf16, #tpu.memory_space<vmem>>, vector<128x256xbf16>
    %cst_13 = arith.constant dense<0.000000e+00> : vector<16x256xf32>
    %18 = tpu.matmul %11, %17, %cst_13 {dimension_numbers = #tpu.dot_dimension_numbers<[1], [0], [0], [1], [0, 0, 1, 1], [], []>} : vector<16x128xbf16>, vector<128x256xbf16>, vector<16x256xf32> -> vector<16x256xf32>
    %c0_14 = arith.constant 0 : index
    %c0_15 = arith.constant 0 : index
    %19 = vector.load %arg7[%c0_14, %c0_15] : memref<1x256xf32, #tpu.memory_space<vmem>>, vector<1x256xf32>
    %20 = vector.broadcast %19 : vector<1x256xf32> to vector<16x256xf32>
    %21 = arith.addf %18, %20 : vector<16x256xf32>
    %22 = arith.mulf %16, %21 : vector<16x256xf32>
    %c0_16 = arith.constant 0 : index
    %c0_17 = arith.constant 0 : index
    %23 = vector.load %arg8[%c0_16, %c0_17] : memref<16x256xf32, #tpu.memory_space<vmem>>, vector<16x256xf32>
    tpu.vector_store %arg8[%c0_16, %c0_17], %22 {strides = array<i32>} : memref<16x256xf32, #tpu.memory_space<vmem>>, vector<16x256xf32>,
    return
  }
  func.func @transform_0(%arg0: i32) -> (i32, i32) {
    %c0_i32 = arith.constant 0 : i32
    %c0_i32_0 = arith.constant 0 : i32
    return %arg0, %c0_i32 : i32, i32
  }
  func.func @transform_1(%arg0: i32) -> (i32, i32) {
    %c0_i32 = arith.constant 0 : i32
    %c0_i32_0 = arith.constant 0 : i32
    %c0_i32_1 = arith.constant 0 : i32
    return %c0_i32, %c0_i32_0 : i32, i32
  }
  func.func @transform_2(%arg0: i32) -> (i32, i32) {
    %c0_i32 = arith.constant 0 : i32
    %c0_i32_0 = arith.constant 0 : i32
    %c0_i32_1 = arith.constant 0 : i32
    return %c0_i32, %c0_i32_0 : i32, i32
  }
  func.func @transform_3(%arg0: i32) -> (i32, i32) {
    %c0_i32 = arith.constant 0 : i32
    %c0_i32_0 = arith.constant 0 : i32
    %c0_i32_1 = arith.constant 0 : i32
    return %c0_i32, %c0_i32_0 : i32, i32
  }
  func.func @transform_4(%arg0: i32) -> (i32, i32) {
    %c0_i32 = arith.constant 0 : i32
    %c0_i32_0 = arith.constant 0 : i32
    %c0_i32_1 = arith.constant 0 : i32
    return %c0_i32, %c0_i32_0 : i32, i32
  }
  func.func @transform_5(%arg0: i32) -> (i32, i32) {
    %c0_i32 = arith.constant 0 : i32
    %c0_i32_0 = arith.constant 0 : i32
    %c0_i32_1 = arith.constant 0 : i32
    return %c0_i32, %c0_i32_0 : i32, i32
  }
  func.func @transform_6(%arg0: i32) -> (i32, i32) {
    %c0_i32 = arith.constant 0 : i32
    %c0_i32_0 = arith.constant 0 : i32
    %c0_i32_1 = arith.constant 0 : i32
    return %c0_i32, %c0_i32_0 : i32, i32
  }
  func.func @transform_7(%arg0: i32) -> (i32, i32) {
    %c0_i32 = arith.constant 0 : i32
    %c0_i32_0 = arith.constant 0 : i32
    return %arg0, %c0_i32 : i32, i32
  }
}

module attributes {stable_mosaic.version = 11 : i64} {
  func.func @matrix_mapper_kernel(%arg0: i32, %arg1: memref<16x32xf32, #tpu.memory_space<vmem>>, %arg2: memref<32x256xbf16, #tpu.memory_space<vmem>>, %arg3: memref<1x256xf32, #tpu.memory_space<vmem>>, %arg4: memref<128x256xbf16, #tpu.memory_space<vmem>>, %arg5: memref<1x256xf32, #tpu.memory_space<vmem>>, %arg6: memref<128x256xbf16, #tpu.memory_space<vmem>>, %arg7: memref<1x256xf32, #tpu.memory_space<vmem>>, %arg8: memref<16x256xf32, #tpu.memory_space<vmem>>) attributes {dimension_semantics = [#tpu.dimension_semantics<parallel>], iteration_bounds = array<i64: 1>, scalar_prefetch = 0 : i64, scratch_operands = 0 : i64, tpu.core_type = #tpu.core_type<tc>, window_params = [{transform_indices = @transform_0, window_bounds = array<i64: 16, 32>}, {pipeline_mode = #tpu.pipeline_mode<synchronous>, transform_indices = @transform_1, window_bounds = array<i64: 32, 256>}, {pipeline_mode = #tpu.pipeline_mode<synchronous>, transform_indices = @transform_2, window_bounds = array<i64: 1, 256>}, {pipeline_mode = #tpu.pipeline_mode<synchronous>, transform_indices = @transform_3, window_bounds = array<i64: 128, 256>}, {pipeline_mode = #tpu.pipeline_mode<synchronous>, transform_indices = @transform_4, window_bounds = array<i64: 1, 256>}, {pipeline_mode = #tpu.pipeline_mode<synchronous>, transform_indices = @transform_5, window_bounds = array<i64: 128, 256>}, {pipeline_mode = #tpu.pipeline_mode<synchronous>, transform_indices = @transform_6, window_bounds = array<i64: 1, 256>}, {transform_indices = @transform_7, window_bounds = array<i64: 16, 256>}]} {
    %c0 = arith.constant 0 : index
    %c0_0 = arith.constant 0 : index
    %0 = vector.load %arg2[%c0, %c0_0] : memref<32x256xbf16, #tpu.memory_space<vmem>>, vector<32x256xbf16>
    %c0_1 = arith.constant 0 : index
    %c0_2 = arith.constant 0 : index
    %1 = vector.load %arg1[%c0_1, %c0_2] : memref<16x32xf32, #tpu.memory_space<vmem>>, vector<16x32xf32>
    %2 = arith.truncf %1 : vector<16x32xf32> to vector<16x32xbf16>
    %cst = arith.constant dense<0.000000e+00> : vector<16x256xf32>
    %3 = tpu.matmul %2, %0, %cst {dimension_numbers = #tpu.dot_dimension_numbers<[1], [0], [0], [1], [0, 0, 1, 1], [], []>} : vector<16x32xbf16>, vector<32x256xbf16>, vector<16x256xf32> -> vector<16x256xf32>
    %c0_3 = arith.constant 0 : index
    %c0_4 = arith.constant 0 : index
    %4 = vector.load %arg3[%c0_3, %c0_4] : memref<1x256xf32, #tpu.memory_space<vmem>>, vector<1x256xf32>
    %5 = vector.broadcast %4 : vector<1x256xf32> to vector<16x256xf32>
    %6 = arith.addf %3, %5 : vector<16x256xf32>
    %cst_5 = arith.constant 0.000000e+00 : f32
    %7 = vector.broadcast %cst_5 : f32 to vector<16x256xf32>
    %8 = arith.maximumf %6, %7 : vector<16x256xf32>
    %9 = arith.truncf %8 : vector<16x256xf32> to vector<16x256xbf16>
    %10 = vector.extract_strided_slice %9 {offsets = [0, 0], sizes = [16, 128], strides = [1, 1]} : vector<16x256xbf16> to vector<16x128xbf16>
    %11 = vector.extract_strided_slice %9 {offsets = [0, 128], sizes = [16, 128], strides = [1, 1]} : vector<16x256xbf16> to vector<16x128xbf16>
    %c0_6 = arith.constant 0 : index
    %c0_7 = arith.constant 0 : index
    %12 = vector.load %arg4[%c0_6, %c0_7] : memref<128x256xbf16, #tpu.memory_space<vmem>>, vector<128x256xbf16>
    %cst_8 = arith.constant dense<0.000000e+00> : vector<16x256xf32>
    %13 = tpu.matmul %10, %12, %cst_8 {dimension_numbers = #tpu.dot_dimension_numbers<[1], [0], [0], [1], [0, 0, 1, 1], [], []>} : vector<16x128xbf16>, vector<128x256xbf16>, vector<16x256xf32> -> vector<16x256xf32>
    %c0_9 = arith.constant 0 : index
    %c0_10 = arith.constant 0 : index
    %14 = vector.load %arg5[%c0_9, %c0_10] : memref<1x256xf32, #tpu.memory_space<vmem>>, vector<1x256xf32>
    %15 = vector.broadcast %14 : vector<1x256xf32> to vector<16x256xf32>
    %16 = arith.addf %13, %15 : vector<16x256xf32>
    %c0_11 = arith.constant 0 : index
    %c0_12 = arith.constant 0 : index
    %17 = vector.load %arg6[%c0_11, %c0_12] : memref<128x256xbf16, #tpu.memory_space<vmem>>, vector<128x256xbf16>
    %cst_13 = arith.constant dense<0.000000e+00> : vector<16x256xf32>
    %18 = tpu.matmul %11, %17, %cst_13 {dimension_numbers = #tpu.dot_dimension_numbers<[1], [0], [0], [1], [0, 0, 1, 1], [], []>} : vector<16x128xbf16>, vector<128x256xbf16>, vector<16x256xf32> -> vector<16x256xf32>
    %c0_14 = arith.constant 0 : index
    %c0_15 = arith.constant 0 : index
    %19 = vector.load %arg7[%c0_14, %c0_15] : memref<1x256xf32, #tpu.memory_space<vmem>>, vector<1x256xf32>
    %20 = vector.broadcast %19 : vector<1x256xf32> to vector<16x256xf32>
    %21 = arith.addf %18, %20 : vector<16x256xf32>
    %22 = arith.mulf %16, %21 : vector<16x256xf32>
    %c0_16 = arith.constant 0 : index
    %c0_17 = arith.constant 0 : index
    %23 = vector.load %arg8[%c0_16, %c0_17] : memref<16x256xf32, #tpu.memory_space<vmem>>, vector<16x256xf32>
    tpu.vector_store %arg8[%c0_16, %c0_17], %22 {strides = array<i32>} : memref<16x256xf32, #tpu.memory_space<vmem>>, vector<16x256xf32>,
    return
  }
  func.func @transform_0(%arg0: i32) -> (i32, i32) {
    %c0_i32 = arith.constant 0 : i32
    %c0_i32_0 = arith.constant 0 : i32
    return %arg0, %c0_i32 : i32, i32
  }
  func.func @transform_1(%arg0: i32) -> (i32, i32) {
    %c0_i32 = arith.constant 0 : i32
    %c0_i32_0 = arith.constant 0 : i32
    %c0_i32_1 = arith.constant 0 : i32
    return %c0_i32, %c0_i32_0 : i32, i32
  }
  func.func @transform_2(%arg0: i32) -> (i32, i32) {
    %c0_i32 = arith.constant 0 : i32
    %c0_i32_0 = arith.constant 0 : i32
    %c0_i32_1 = arith.constant 0 : i32
    return %c0_i32, %c0_i32_0 : i32, i32
  }
  func.func @transform_3(%arg0: i32) -> (i32, i32) {
    %c0_i32 = arith.constant 0 : i32
    %c0_i32_0 = arith.constant 0 : i32
    %c0_i32_1 = arith.constant 0 : i32
    return %c0_i32, %c0_i32_0 : i32, i32
  }
  func.func @transform_4(%arg0: i32) -> (i32, i32) {
    %c0_i32 = arith.constant 0 : i32
    %c0_i32_0 = arith.constant 0 : i32
    %c0_i32_1 = arith.constant 0 : i32
    return %c0_i32, %c0_i32_0 : i32, i32
  }
  func.func @transform_5(%arg0: i32) -> (i32, i32) {
    %c0_i32 = arith.constant 0 : i32
    %c0_i32_0 = arith.constant 0 : i32
    %c0_i32_1 = arith.constant 0 : i32
    return %c0_i32, %c0_i32_0 : i32, i32
  }
  func.func @transform_6(%arg0: i32) -> (i32, i32) {
    %c0_i32 = arith.constant 0 : i32
    %c0_i32_0 = arith.constant 0 : i32
    %c0_i32_1 = arith.constant 0 : i32
    return %c0_i32, %c0_i32_0 : i32, i32
  }
  func.func @transform_7(%arg0: i32) -> (i32, i32) {
    %c0_i32 = arith.constant 0 : i32
    %c0_i32_0 = arith.constant 0 : i32
    return %arg0, %c0_i32 : i32, i32
  }
}

</mosaic_0001>

<llo_original>
// kernel: tpu_custom_call.1
$region0: #{tpu_custom_call.1}
  #allocation0 [shape = 'u32[]', space=smem, size = 0x4, offset = 0x4, fixed_abs, tag = 'smem constant byte address 0x4 - core index']
  #allocation1 [shape = 'u32[144,128]{1,0:T(1,128)}', space=vmem, size = 0x12000, scoped, tag = 'internal scratch']
  %s0 = inlined_call_operand.hbm [shape: f32[16,32], index: 0, kind: input, shape index: {}]
  %s1 = inlined_call_operand.hbm [shape: bf16[32,256], index: 1, kind: input, shape index: {}]
  %s2 = inlined_call_operand.vmem [shape: f32[1,256], index: 2, kind: input, shape index: {}]
  %s3 = inlined_call_operand.hbm [shape: bf16[128,256], index: 3, kind: input, shape index: {}]
  %s4 = inlined_call_operand.vmem [shape: f32[1,256], index: 4, kind: input, shape index: {}]
  %s5 = inlined_call_operand.hbm [shape: bf16[128,256], index: 5, kind: input, shape index: {}]
  %s6 = inlined_call_operand.vmem [shape: f32[1,256], index: 6, kind: input, shape index: {}]
  %s7 = inlined_call_operand.hbm [shape: f32[16,256], index: 7, kind: output, shape index: {}]
  %s8 = sld [smem:[#allocation0]]
  $region54: #{tpu_custom_call.1} parent=0
    _
  %s10 = ssub.s32 1, %s8
  %s11 = scalar_select 0, %s10, %s8
  $region1: #{tpu_custom_call.1} parent=0
    #allocation2 [shape = 'u8[8192]{0}', space=vmem, size = 0x2000, scoped, tag = 'input window, operand 0, single buffered']
    #allocation3 [shape = 's32[1]{0}', space=sflag, size = 0x4, scoped, tag = 'scoped memory for tpu_custom_call.1']
    #allocation4 [shape = 's32[1]{0}', space=sflag, size = 0x4, scoped, tag = 'scoped memory for tpu_custom_call.1']
    #allocation5 [shape = 'u8[16384]{0}', space=vmem, size = 0x4000, scoped, tag = 'input window, operand 1, single buffered']
    #allocation6 [shape = 's32[1]{0}', space=sflag, size = 0x4, scoped, tag = 'scoped memory for tpu_custom_call.1']
    #allocation7 [shape = 'u8[65536]{0}', space=vmem, size = 0x10000, scoped, tag = 'input window, operand 3, single buffered']
    #allocation8 [shape = 'u8[65536]{0}', space=vmem, size = 0x10000, scoped, tag = 'input window, operand 5, single buffered']
    #allocation9 [shape = 's32[1]{0}', space=sflag, size = 0x4, scoped, tag = 'scoped memory for tpu_custom_call.1']
    #allocation10 [shape = 'u8[16384]{0}', space=vmem, size = 0x4000, scoped, tag = 'output window, operand 0, single buffered']
    %12 = vsyncpa [#allocation3], 0
    %13 = vsyncpa [#allocation6], 0
    %14 = vsyncpa [#allocation9], 0
    %15 = vsyncpa [#allocation4], 0
    // Predicated region
    $region2: #{tpu_custom_call.1} parent=1 // pred_check
      _
    $region3: #{tpu_custom_call.1} parent=1 // pred_check_branch
      %17 = sbr.rel (0) target = $region5
    $region4: #{tpu_custom_call.1} parent=1 // pred_region
      %s19 = ssub.s32 256, 256
      %20 = vsyncadd [#allocation3], %s19
      %s21 = sshll.u32 [#allocation2], 4
      %s22 = int_to_ptr.vmem [resolvable:$true] %s21
      %27 = dma.hbm_to_vmem [thread:$0]  %s0, 256, %s22, [#allocation3], 128, 128, 8
    $region5: #{tpu_custom_call.1} parent=1 // pred_fallthru
      _
    // Predicated region
    $region6: #{tpu_custom_call.1} parent=1 // pred_check
      _
    $region7: #{tpu_custom_call.1} parent=1 // pred_check_branch
      %29 = sbr.rel (0) target = $region9
    $region8: #{tpu_custom_call.1} parent=1 // pred_region
      %s31 = ssub.s32 512, 512
      %32 = vsyncadd [#allocation6], %s31
      %s33 = sshll.u32 [#allocation5], 4
      %s34 = int_to_ptr.vmem [resolvable:$true] %s33
      %39 = dma.hbm_to_vmem [thread:$0]  %s1, 512, %s34, [#allocation6], 128, 128, 8
    $region9: #{tpu_custom_call.1} parent=1 // pred_fallthru
      _
    // Predicated region
    $region10: #{tpu_custom_call.1} parent=1 // pred_check
      _
    $region11: #{tpu_custom_call.1} parent=1 // pred_check_branch
      %41 = sbr.rel (0) target = $region13
    $region12: #{tpu_custom_call.1} parent=1 // pred_region
      _
    $region13: #{tpu_custom_call.1} parent=1 // pred_fallthru
      _
    // Predicated region
    $region14: #{tpu_custom_call.1} parent=1 // pred_check
      _
    $region15: #{tpu_custom_call.1} parent=1 // pred_check_branch
      %43 = sbr.rel (0) target = $region17
    $region16: #{tpu_custom_call.1} parent=1 // pred_region
      %s45 = ssub.s32 2048, 2048
      %46 = vsyncadd [#allocation6], %s45
      %s47 = sshll.u32 [#allocation7], 4
      %s48 = int_to_ptr.vmem [resolvable:$true] %s47
      %53 = dma.hbm_to_vmem [thread:$0]  %s3, 2048, %s48, [#allocation6], 128, 128, 8
    $region17: #{tpu_custom_call.1} parent=1 // pred_fallthru
      _
    // Predicated region
    $region18: #{tpu_custom_call.1} parent=1 // pred_check
      _
    $region19: #{tpu_custom_call.1} parent=1 // pred_check_branch
      %55 = sbr.rel (0) target = $region21
    $region20: #{tpu_custom_call.1} parent=1 // pred_region
      _
    $region21: #{tpu_custom_call.1} parent=1 // pred_fallthru
      _
    // Predicated region
    $region22: #{tpu_custom_call.1} parent=1 // pred_check
      _
    $region23: #{tpu_custom_call.1} parent=1 // pred_check_branch
      %57 = sbr.rel (0) target = $region25
    $region24: #{tpu_custom_call.1} parent=1 // pred_region
      %s59 = ssub.s32 2048, 2048
      %60 = vsyncadd [#allocation9], %s59
      %s61 = sshll.u32 [#allocation8], 4
      %s62 = int_to_ptr.vmem [resolvable:$true] %s61
      %67 = dma.hbm_to_vmem [thread:$0]  %s5, 2048, %s62, [#allocation9], 128, 128, 8
    $region25: #{tpu_custom_call.1} parent=1 // pred_fallthru
      _
    // Predicated region
    $region26: #{tpu_custom_call.1} parent=1 // pred_check
      _
    $region27: #{tpu_custom_call.1} parent=1 // pred_check_branch
      %69 = sbr.rel (0) target = $region29
    $region28: #{tpu_custom_call.1} parent=1 // pred_region
      _
    $region29: #{tpu_custom_call.1} parent=1 // pred_fallthru
      _
    // Predicated region
    $region30: #{tpu_custom_call.1} parent=1 // pred_check
      _
    $region31: #{tpu_custom_call.1} parent=1 // pred_check_branch
      %71 = sbr.rel (0) target = $region33
    $region32: #{tpu_custom_call.1} parent=1 // pred_region
      %72 = dma.done [#allocation3], 256
    $region33: #{tpu_custom_call.1} parent=1 // pred_fallthru
      _
    // Predicated region
    $region34: #{tpu_custom_call.1} parent=1 // pred_check
      _
    $region35: #{tpu_custom_call.1} parent=1 // pred_check_branch
      %74 = sbr.rel (0) target = $region37
    $region36: #{tpu_custom_call.1} parent=1 // pred_region
      %75 = dma.done [#allocation6], 512
    $region37: #{tpu_custom_call.1} parent=1 // pred_fallthru
      _
    // Predicated region
    $region38: #{tpu_custom_call.1} parent=1 // pred_check
      _
    $region39: #{tpu_custom_call.1} parent=1 // pred_check_branch
      %77 = sbr.rel (0) target = $region41
    $region40: #{tpu_custom_call.1} parent=1 // pred_region
      %78 = dma.done [#allocation6], 2048
    $region41: #{tpu_custom_call.1} parent=1 // pred_fallthru
      _
    // Predicated region
    $region42: #{tpu_custom_call.1} parent=1 // pred_check
      _
    $region43: #{tpu_custom_call.1} parent=1 // pred_check_branch
      %80 = sbr.rel (0) target = $region45
    $region44: #{tpu_custom_call.1} parent=1 // pred_region
      %81 = dma.done [#allocation9], 2048
    $region45: #{tpu_custom_call.1} parent=1 // pred_fallthru
      _
    %v83 = vld [vmem:[#allocation5] sm:$0xff]
    %v84 = vld [vmem:[#allocation5 + $0x8] sm:$0xff]
    %v85 = vld [vmem:[#allocation5 + $0x10] sm:$0xff]
    %v86 = vld [vmem:[#allocation5 + $0x18] sm:$0xff]
    %v87 = vld [vmem:[#allocation2] sm:$0xff]
    %v88 = vld [vmem:[#allocation2 + $0x8] sm:$0xff]
    %v89 = vpack.c.bf16 %v88, %v87
    %v90 = vld [vmem:[%s2] sm:$0x3]
    %v92 = vlaneseq
    %v93 = vshrl.u32 %v92, 7
    %v94 = vsub.s32 0, %v93
    %v95 = vrot.slane %v90, %v94
    %v96 = vlaneseq
    %v97 = vshrl.u32 %v96, 7
    %v98 = vsub.s32 1, %v97
    %v99 = vrot.slane %v90, %v98
    %v106 = vunpack.c.l.b16 %v83
    %v107 = vunpack.c.h.b16 %v83
    %v108 = vunpack.c.l.b16 %v84
    %v109 = vunpack.c.h.b16 %v84
    %v110 = vunpack.c.l.b16 %v85
    %v111 = vunpack.c.h.b16 %v85
    %v112 = vunpack.c.l.b16 %v86
    %v113 = vunpack.c.h.b16 %v86
    %v114 = vpack.c.b16 %v108, %v106
    %v115 = vpack.c.b16 %v109, %v107
    %v116 = vpack.c.b16 %v112, %v110
    %v117 = vpack.c.b16 %v113, %v111
    %vm122 = vcmask 261120
    %v124 = vsel %vm122, %v89, 0
    %126 = vmatprep.subr.bf16.mxu0 %v115
    %127 = vmatpush1.bf16.msra.mxu0 %v114
    %128 = vmatprep.subr.bf16.mxu0 %v117
    %129 = vmatpush1.bf16.msra.mxu0 %v116
    %130 = vmatprep.subr.bf16.mxu0 0
    %131 = vmatpush1.bf16.msra.mxu0 0
    %132 = vmatprep.subr.bf16.mxu0 0
    %133 = vmatpush1.bf16.msra.mxu0 0
    %134 = vmatprep.subr.bf16.mxu0 0
    %135 = vmatpush1.bf16.msra.mxu0 0
    %136 = vmatprep.subr.bf16.mxu0 0
    %137 = vmatpush1.bf16.msra.mxu0 0
    %138 = vmatprep.subr.bf16.mxu0 0
    %139 = vmatpush1.bf16.msra.mxu0 0
    %140 = vmatprep.subr.bf16.mxu0 0
    %141 = vmatpush1.bf16.msra.mxu0 0
    %142 = vmatprep.subr.bf16.mxu0 0
    %143 = vmatpush1.bf16.msra.mxu0 0
    %144 = vmatprep.subr.bf16.mxu0 0
    %145 = vmatpush1.bf16.msra.mxu0 0
    %146 = vmatprep.subr.bf16.mxu0 0
    %147 = vmatpush1.bf16.msra.mxu0 0
    %148 = vmatprep.subr.bf16.mxu0 0
    %149 = vmatpush1.bf16.msra.mxu0 0
    %150 = vmatprep.subr.bf16.mxu0 0
    %151 = vmatpush1.bf16.msra.mxu0 0
    %152 = vmatprep.subr.bf16.mxu0 0
    %153 = vmatpush1.bf16.msra.mxu0 0
    %154 = vmatprep.subr.bf16.mxu0 0
    %155 = vmatpush1.bf16.msra.mxu0 0
    %156 = vmatprep.subr.bf16.mxu0 0
    %157 = vmatpush1.bf16.msra.mxu0 0
    %158 = vmatprep.mubr.bf16.mxu0 0
    %159 = vmatmul.mubr.bf16.gmra.mrb[0].mxu0 %v124
    %v160 = vpop.f32.mrb[0].mxu0
    %v161 = vadd.f32 %v95, %v160
    %v162 = vpop.f32.mrb[0].mxu0
    %v163 = vadd.f32 %v99, %v162
    %v164 = vpop.f32.mrb[0].mxu0
    %v165 = vadd.f32 %v95, %v164
    %v166 = vpop.f32.mrb[0].mxu0
    %v167 = vadd.f32 %v99, %v166
    %168 = vdwg.mxu0
    %v169 = vmax.f32 %v161, 0.0
    %v170 = vmax.f32 %v163, 0.0
    %v171 = vmax.f32 %v165, 0.0
    %v172 = vmax.f32 %v167, 0.0
    %v173 = vpack.c.bf16 %v171, %v169
    %v174 = vpack.c.bf16 %v172, %v170
    %v175 = vld [vmem:[#allocation7] sm:$0xff]
    %v176 = vld [vmem:[#allocation7 + $0x8] sm:$0xff]
    %v177 = vld [vmem:[#allocation7 + $0x10] sm:$0xff]
    %v178 = vld [vmem:[#allocation7 + $0x18] sm:$0xff]
    %v179 = vld [vmem:[#allocation7 + $0x20] sm:$0xff]
    %v180 = vld [vmem:[#allocation7 + $0x28] sm:$0xff]
    %v181 = vld [vmem:[#allocation7 + $0x30] sm:$0xff]
    %v182 = vld [vmem:[#allocation7 + $0x38] sm:$0xff]
    %v183 = vld [vmem:[#allocation7 + $0x40] sm:$0xff]
    %v184 = vld [vmem:[#allocation7 + $0x48] sm:$0xff]
    %v185 = vld [vmem:[#allocation7 + $0x50] sm:$0xff]
    %v186 = vld [vmem:[#allocation7 + $0x58] sm:$0xff]
    %v187 = vld [vmem:[#allocation7 + $0x60] sm:$0xff]
    %v188 = vld [vmem:[#allocation7 + $0x68] sm:$0xff]
    %v189 = vld [vmem:[#allocation7 + $0x70] sm:$0xff]
    %v190 = vld [vmem:[#allocation7 + $0x78] sm:$0xff]
    %v191 = vld [vmem:[%s4] sm:$0x3]
    %v193 = vlaneseq
    %v194 = vshrl.u32 %v193, 7
    %v195 = vsub.s32 0, %v194
    %v196 = vrot.slane %v191, %v195
    %v197 = vlaneseq
    %v198 = vshrl.u32 %v197, 7
    %v199 = vsub.s32 1, %v198
    %v200 = vrot.slane %v191, %v199
    %v219 = vunpack.c.l.b16 %v175
    %v220 = vunpack.c.h.b16 %v175
    %v221 = vunpack.c.l.b16 %v176
    %v222 = vunpack.c.h.b16 %v176
    %v223 = vunpack.c.l.b16 %v177
    %v224 = vunpack.c.h.b16 %v177
    %v225 = vunpack.c.l.b16 %v178
    %v226 = vunpack.c.h.b16 %v178
    %v227 = vunpack.c.l.b16 %v179
    %v228 = vunpack.c.h.b16 %v179
    %v229 = vunpack.c.l.b16 %v180
    %v230 = vunpack.c.h.b16 %v180
    %v231 = vunpack.c.l.b16 %v181
    %v232 = vunpack.c.h.b16 %v181
    %v233 = vunpack.c.l.b16 %v182
    %v234 = vunpack.c.h.b16 %v182
    %v235 = vunpack.c.l.b16 %v183
    %v236 = vunpack.c.h.b16 %v183
    %v237 = vunpack.c.l.b16 %v184
    %v238 = vunpack.c.h.b16 %v184
    %v239 = vunpack.c.l.b16 %v185
    %v240 = vunpack.c.h.b16 %v185
    %v241 = vunpack.c.l.b16 %v186
    %v242 = vunpack.c.h.b16 %v186
    %v243 = vunpack.c.l.b16 %v187
    %v244 = vunpack.c.h.b16 %v187
    %v245 = vunpack.c.l.b16 %v188
    %v246 = vunpack.c.h.b16 %v188
    %v247 = vunpack.c.l.b16 %v189
    %v248 = vunpack.c.h.b16 %v189
    %v249 = vunpack.c.l.b16 %v190
    %v250 = vunpack.c.h.b16 %v190
    %v251 = vpack.c.b16 %v221, %v219
    %v252 = vpack.c.b16 %v222, %v220
    %v253 = vpack.c.b16 %v225, %v223
    %v254 = vpack.c.b16 %v226, %v224
    %v255 = vpack.c.b16 %v229, %v227
    %v256 = vpack.c.b16 %v230, %v228
    %v257 = vpack.c.b16 %v233, %v231
    %v258 = vpack.c.b16 %v234, %v232
    %v259 = vpack.c.b16 %v237, %v235
    %v260 = vpack.c.b16 %v238, %v236
    %v261 = vpack.c.b16 %v241, %v239
    %v262 = vpack.c.b16 %v242, %v240
    %v263 = vpack.c.b16 %v245, %v243
    %v264 = vpack.c.b16 %v246, %v244
    %v265 = vpack.c.b16 %v249, %v247
    %v266 = vpack.c.b16 %v250, %v248
    %283 = vmatprep.subr.bf16.mxu0 %v252
    %284 = vmatpush1.bf16.msra.mxu0 %v251
    %285 = vmatprep.subr.bf16.mxu0 %v254
    %286 = vmatpush1.bf16.msra.mxu0 %v253
    %287 = vmatprep.subr.bf16.mxu0 %v256
    %288 = vmatpush1.bf16.msra.mxu0 %v255
    %289 = vmatprep.subr.bf16.mxu0 %v258
    %290 = vmatpush1.bf16.msra.mxu0 %v257
    %291 = vmatprep.subr.bf16.mxu0 %v260
    %292 = vmatpush1.bf16.msra.mxu0 %v259
    %293 = vmatprep.subr.bf16.mxu0 %v262
    %294 = vmatpush1.bf16.msra.mxu0 %v261
    %295 = vmatprep.subr.bf16.mxu0 %v264
    %296 = vmatpush1.bf16.msra.mxu0 %v263
    %297 = vmatprep.subr.bf16.mxu0 %v266
    %298 = vmatpush1.bf16.msra.mxu0 %v265
    %299 = vmatprep.subr.bf16.mxu0 0
    %300 = vmatpush1.bf16.msra.mxu0 0
    %301 = vmatprep.subr.bf16.mxu0 0
    %302 = vmatpush1.bf16.msra.mxu0 0
    %303 = vmatprep.subr.bf16.mxu0 0
    %304 = vmatpush1.bf16.msra.mxu0 0
    %305 = vmatprep.subr.bf16.mxu0 0
    %306 = vmatpush1.bf16.msra.mxu0 0
    %307 = vmatprep.subr.bf16.mxu0 0
    %308 = vmatpush1.bf16.msra.mxu0 0
    %309 = vmatprep.subr.bf16.mxu0 0
    %310 = vmatpush1.bf16.msra.mxu0 0
    %311 = vmatprep.subr.bf16.mxu0 0
    %312 = vmatpush1.bf16.msra.mxu0 0
    %313 = vmatprep.subr.bf16.mxu0 0
    %314 = vmatpush1.bf16.msra.mxu0 0
    %315 = vmatprep.mubr.bf16.mxu0 0
    %316 = vmatmul.mubr.bf16.gmra.mrb[0].mxu0 %v173
    %v317 = vpop.f32.mrb[0].mxu0
    %v318 = vadd.f32 %v196, %v317
    %v319 = vpop.f32.mrb[0].mxu0
    %v320 = vadd.f32 %v200, %v319
    %v321 = vpop.f32.mrb[0].mxu0
    %v322 = vadd.f32 %v196, %v321
    %v323 = vpop.f32.mrb[0].mxu0
    %v324 = vadd.f32 %v200, %v323
    %325 = vdwg.mxu0
    %v326 = vld [vmem:[#allocation8] sm:$0xff]
    %v327 = vld [vmem:[#allocation8 + $0x8] sm:$0xff]
    %v328 = vld [vmem:[#allocation8 + $0x10] sm:$0xff]
    %v329 = vld [vmem:[#allocation8 + $0x18] sm:$0xff]
    %v330 = vld [vmem:[#allocation8 + $0x20] sm:$0xff]
    %v331 = vld [vmem:[#allocation8 + $0x28] sm:$0xff]
    %v332 = vld [vmem:[#allocation8 + $0x30] sm:$0xff]
    %v333 = vld [vmem:[#allocation8 + $0x38] sm:$0xff]
    %v334 = vld [vmem:[#allocation8 + $0x40] sm:$0xff]
    %v335 = vld [vmem:[#allocation8 + $0x48] sm:$0xff]
    %v336 = vld [vmem:[#allocation8 + $0x50] sm:$0xff]
    %v337 = vld [vmem:[#allocation8 + $0x58] sm:$0xff]
    %v338 = vld [vmem:[#allocation8 + $0x60] sm:$0xff]
    %v339 = vld [vmem:[#allocation8 + $0x68] sm:$0xff]
    %v340 = vld [vmem:[#allocation8 + $0x70] sm:$0xff]
    %v341 = vld [vmem:[#allocation8 + $0x78] sm:$0xff]
    %v342 = vld [vmem:[%s6] sm:$0x3]
    %v344 = vlaneseq
    %v345 = vshrl.u32 %v344, 7
    %v346 = vsub.s32 0, %v345
    %v347 = vrot.slane %v342, %v346
    %v348 = vlaneseq
    %v349 = vshrl.u32 %v348, 7
    %v350 = vsub.s32 1, %v349
    %v351 = vrot.slane %v342, %v350
    %v370 = vunpack.c.l.b16 %v326
    %v371 = vunpack.c.h.b16 %v326
    %v372 = vunpack.c.l.b16 %v327
    %v373 = vunpack.c.h.b16 %v327
    %v374 = vunpack.c.l.b16 %v328
    %v375 = vunpack.c.h.b16 %v328
    %v376 = vunpack.c.l.b16 %v329
    %v377 = vunpack.c.h.b16 %v329
    %v378 = vunpack.c.l.b16 %v330
    %v379 = vunpack.c.h.b16 %v330
    %v380 = vunpack.c.l.b16 %v331
    %v381 = vunpack.c.h.b16 %v331
    %v382 = vunpack.c.l.b16 %v332
    %v383 = vunpack.c.h.b16 %v332
    %v384 = vunpack.c.l.b16 %v333
    %v385 = vunpack.c.h.b16 %v333
    %v386 = vunpack.c.l.b16 %v334
    %v387 = vunpack.c.h.b16 %v334
    %v388 = vunpack.c.l.b16 %v335
    %v389 = vunpack.c.h.b16 %v335
    %v390 = vunpack.c.l.b16 %v336
    %v391 = vunpack.c.h.b16 %v336
    %v392 = vunpack.c.l.b16 %v337
    %v393 = vunpack.c.h.b16 %v337
    %v394 = vunpack.c.l.b16 %v338
    %v395 = vunpack.c.h.b16 %v338
    %v396 = vunpack.c.l.b16 %v339
    %v397 = vunpack.c.h.b16 %v339
    %v398 = vunpack.c.l.b16 %v340
    %v399 = vunpack.c.h.b16 %v340
    %v400 = vunpack.c.l.b16 %v341
    %v401 = vunpack.c.h.b16 %v341
    %v402 = vpack.c.b16 %v372, %v370
    %v403 = vpack.c.b16 %v373, %v371
    %v404 = vpack.c.b16 %v376, %v374
    %v405 = vpack.c.b16 %v377, %v375
    %v406 = vpack.c.b16 %v380, %v378
    %v407 = vpack.c.b16 %v381, %v379
    %v408 = vpack.c.b16 %v384, %v382
    %v409 = vpack.c.b16 %v385, %v383
    %v410 = vpack.c.b16 %v388, %v386
    %v411 = vpack.c.b16 %v389, %v387
    %v412 = vpack.c.b16 %v392, %v390
    %v413 = vpack.c.b16 %v393, %v391
    %v414 = vpack.c.b16 %v396, %v394
    %v415 = vpack.c.b16 %v397, %v395
    %v416 = vpack.c.b16 %v400, %v398
    %v417 = vpack.c.b16 %v401, %v399
    %434 = vmatprep.subr.bf16.mxu0 %v403
    %435 = vmatpush1.bf16.msra.mxu0 %v402
    %436 = vmatprep.subr.bf16.mxu0 %v405
    %437 = vmatpush1.bf16.msra.mxu0 %v404
    %438 = vmatprep.subr.bf16.mxu0 %v407
    %439 = vmatpush1.bf16.msra.mxu0 %v406
    %440 = vmatprep.subr.bf16.mxu0 %v409
    %441 = vmatpush1.bf16.msra.mxu0 %v408
    %442 = vmatprep.subr.bf16.mxu0 %v411
    %443 = vmatpush1.bf16.msra.mxu0 %v410
    %444 = vmatprep.subr.bf16.mxu0 %v413
    %445 = vmatpush1.bf16.msra.mxu0 %v412
    %446 = vmatprep.subr.bf16.mxu0 %v415
    %447 = vmatpush1.bf16.msra.mxu0 %v414
    %448 = vmatprep.subr.bf16.mxu0 %v417
    %449 = vmatpush1.bf16.msra.mxu0 %v416
    %450 = vmatprep.subr.bf16.mxu0 0
    %451 = vmatpush1.bf16.msra.mxu0 0
    %452 = vmatprep.subr.bf16.mxu0 0
    %453 = vmatpush1.bf16.msra.mxu0 0
    %454 = vmatprep.subr.bf16.mxu0 0
    %455 = vmatpush1.bf16.msra.mxu0 0
    %456 = vmatprep.subr.bf16.mxu0 0
    %457 = vmatpush1.bf16.msra.mxu0 0
    %458 = vmatprep.subr.bf16.mxu0 0
    %459 = vmatpush1.bf16.msra.mxu0 0
    %460 = vmatprep.subr.bf16.mxu0 0
    %461 = vmatpush1.bf16.msra.mxu0 0
    %462 = vmatprep.subr.bf16.mxu0 0
    %463 = vmatpush1.bf16.msra.mxu0 0
    %464 = vmatprep.subr.bf16.mxu0 0
    %465 = vmatpush1.bf16.msra.mxu0 0
    %466 = vmatprep.mubr.bf16.mxu0 0
    %467 = vmatmul.mubr.bf16.gmra.mrb[0].mxu0 %v174
    %v468 = vpop.f32.mrb[0].mxu0
    %v469 = vadd.f32 %v347, %v468
    %v470 = vpop.f32.mrb[0].mxu0
    %v471 = vadd.f32 %v351, %v470
    %v472 = vpop.f32.mrb[0].mxu0
    %v473 = vadd.f32 %v347, %v472
    %v474 = vpop.f32.mrb[0].mxu0
    %v475 = vadd.f32 %v351, %v474
    %476 = vdwg.mxu0
    %v477 = vmul.f32 %v318, %v469
    %v478 = vmul.f32 %v320, %v471
    %v479 = vmul.f32 %v322, %v473
    %v480 = vmul.f32 %v324, %v475
    %481 = vst [vmem:[#allocation10] sm:$0xff] %v477
    %482 = vst [vmem:[#allocation10 + $0x8] sm:$0xff] %v478
    %483 = vst [vmem:[#allocation10 + $0x10] sm:$0xff] %v479
    %484 = vst [vmem:[#allocation10 + $0x18] sm:$0xff] %v480
    // Predicated region
    $region46: #{tpu_custom_call.1} parent=1 // pred_check
      _
    $region47: #{tpu_custom_call.1} parent=1 // pred_check_branch
      %486 = sbr.rel (0) target = $region49
    $region48: #{tpu_custom_call.1} parent=1 // pred_region
      %s488 = ssub.s32 512, 512
      %489 = vsyncadd [#allocation4], %s488
      %s490 = sshll.u32 [#allocation10], 4
      %s491 = int_to_ptr.vmem [resolvable:$true] %s490
      %496 = dma.vmem_to_hbm [thread:$0]  %s491, 512, %s7, [#allocation4], 256, 256, 16
    $region49: #{tpu_custom_call.1} parent=1 // pred_fallthru
      _
    // Predicated region
    $region50: #{tpu_custom_call.1} parent=1 // pred_check
      _
    $region51: #{tpu_custom_call.1} parent=1 // pred_check_branch
      %498 = sbr.rel (0) target = $region53
    $region52: #{tpu_custom_call.1} parent=1 // pred_region
      %499 = dma.done [#allocation4], 512
    $region53: #{tpu_custom_call.1} parent=1 // pred_fallthru
      _
    %500 = vsyncpa [#allocation3], 1
    %501 = vsyncpa [#allocation6], 1
    %502 = vsyncpa [#allocation9], 1
    %503 = vsyncpa [#allocation4], 1

// kernel: tpu_custom_call.1
$region0: #{tpu_custom_call.1}
  #allocation0 [shape = 'u32[]', space=smem, size = 0x4, offset = 0x4, fixed_abs, tag = 'smem constant byte address 0x4 - core index']
  #allocation1 [shape = 'u32[144,128]{1,0:T(1,128)}', space=vmem, size = 0x12000, scoped, tag = 'internal scratch']
  %s0 = inlined_call_operand.hbm [shape: f32[16,32], index: 0, kind: input, shape index: {}]
  %s1 = inlined_call_operand.hbm [shape: bf16[32,256], index: 1, kind: input, shape index: {}]
  %s2 = inlined_call_operand.vmem [shape: f32[1,256], index: 2, kind: input, shape index: {}]
  %s3 = inlined_call_operand.hbm [shape: bf16[128,256], index: 3, kind: input, shape index: {}]
  %s4 = inlined_call_operand.vmem [shape: f32[1,256], index: 4, kind: input, shape index: {}]
  %s5 = inlined_call_operand.hbm [shape: bf16[128,256], index: 5, kind: input, shape index: {}]
  %s6 = inlined_call_operand.vmem [shape: f32[1,256], index: 6, kind: input, shape index: {}]
  %s7 = inlined_call_operand.hbm [shape: f32[16,256], index: 7, kind: output, shape index: {}]
  %s8 = sld [smem:[#allocation0]]
  $region54: #{tpu_custom_call.1} parent=0
    _
  %s10 = ssub.s32 1, %s8
  %s11 = scalar_select 0, %s10, %s8
  $region1: #{tpu_custom_call.1} parent=0
    #allocation2 [shape = 'u8[8192]{0}', space=vmem, size = 0x2000, scoped, tag = 'input window, operand 0, single buffered']
    #allocation3 [shape = 's32[1]{0}', space=sflag, size = 0x4, scoped, tag = 'scoped memory for tpu_custom_call.1']
    #allocation4 [shape = 's32[1]{0}', space=sflag, size = 0x4, scoped, tag = 'scoped memory for tpu_custom_call.1']
    #allocation5 [shape = 'u8[16384]{0}', space=vmem, size = 0x4000, scoped, tag = 'input window, operand 1, single buffered']
    #allocation6 [shape = 's32[1]{0}', space=sflag, size = 0x4, scoped, tag = 'scoped memory for tpu_custom_call.1']
    #allocation7 [shape = 'u8[65536]{0}', space=vmem, size = 0x10000, scoped, tag = 'input window, operand 3, single buffered']
    #allocation8 [shape = 'u8[65536]{0}', space=vmem, size = 0x10000, scoped, tag = 'input window, operand 5, single buffered']
    #allocation9 [shape = 's32[1]{0}', space=sflag, size = 0x4, scoped, tag = 'scoped memory for tpu_custom_call.1']
    #allocation10 [shape = 'u8[16384]{0}', space=vmem, size = 0x4000, scoped, tag = 'output window, operand 0, single buffered']
    %12 = vsyncpa [#allocation3], 0
    %13 = vsyncpa [#allocation6], 0
    %14 = vsyncpa [#allocation9], 0
    %15 = vsyncpa [#allocation4], 0
    // Predicated region
    $region2: #{tpu_custom_call.1} parent=1 // pred_check
      _
    $region3: #{tpu_custom_call.1} parent=1 // pred_check_branch
      %17 = sbr.rel (0) target = $region5
    $region4: #{tpu_custom_call.1} parent=1 // pred_region
      %s19 = ssub.s32 256, 256
      %20 = vsyncadd [#allocation3], %s19
      %s21 = sshll.u32 [#allocation2], 4
      %s22 = int_to_ptr.vmem [resolvable:$true] %s21
      %27 = dma.hbm_to_vmem [thread:$0]  %s0, 256, %s22, [#allocation3], 128, 128, 8
    $region5: #{tpu_custom_call.1} parent=1 // pred_fallthru
      _
    // Predicated region
    $region6: #{tpu_custom_call.1} parent=1 // pred_check
      _
    $region7: #{tpu_custom_call.1} parent=1 // pred_check_branch
      %29 = sbr.rel (0) target = $region9
    $region8: #{tpu_custom_call.1} parent=1 // pred_region
      %s31 = ssub.s32 512, 512
      %32 = vsyncadd [#allocation6], %s31
      %s33 = sshll.u32 [#allocation5], 4
      %s34 = int_to_ptr.vmem [resolvable:$true] %s33
      %39 = dma.hbm_to_vmem [thread:$0]  %s1, 512, %s34, [#allocation6], 128, 128, 8
    $region9: #{tpu_custom_call.1} parent=1 // pred_fallthru
      _
    // Predicated region
    $region10: #{tpu_custom_call.1} parent=1 // pred_check
      _
    $region11: #{tpu_custom_call.1} parent=1 // pred_check_branch
      %41 = sbr.rel (0) target = $region13
    $region12: #{tpu_custom_call.1} parent=1 // pred_region
      _
    $region13: #{tpu_custom_call.1} parent=1 // pred_fallthru
      _
    // Predicated region
    $region14: #{tpu_custom_call.1} parent=1 // pred_check
      _
    $region15: #{tpu_custom_call.1} parent=1 // pred_check_branch
      %43 = sbr.rel (0) target = $region17
    $region16: #{tpu_custom_call.1} parent=1 // pred_region
      %s45 = ssub.s32 2048, 2048
      %46 = vsyncadd [#allocation6], %s45
      %s47 = sshll.u32 [#allocation7], 4
      %s48 = int_to_ptr.vmem [resolvable:$true] %s47
      %53 = dma.hbm_to_vmem [thread:$0]  %s3, 2048, %s48, [#allocation6], 128, 128, 8
    $region17: #{tpu_custom_call.1} parent=1 // pred_fallthru
      _
    // Predicated region
    $region18: #{tpu_custom_call.1} parent=1 // pred_check
      _
    $region19: #{tpu_custom_call.1} parent=1 // pred_check_branch
      %55 = sbr.rel (0) target = $region21
    $region20: #{tpu_custom_call.1} parent=1 // pred_region
      _
    $region21: #{tpu_custom_call.1} parent=1 // pred_fallthru
      _
    // Predicated region
    $region22: #{tpu_custom_call.1} parent=1 // pred_check
      _
    $region23: #{tpu_custom_call.1} parent=1 // pred_check_branch
      %57 = sbr.rel (0) target = $region25
    $region24: #{tpu_custom_call.1} parent=1 // pred_region
      %s59 = ssub.s32 2048, 2048
      %60 = vsyncadd [#allocation9], %s59
      %s61 = sshll.u32 [#allocation8], 4
      %s62 = int_to_ptr.vmem [resolvable:$true] %s61
      %67 = dma.hbm_to_vmem [thread:$0]  %s5, 2048, %s62, [#allocation9], 128, 128, 8
    $region25: #{tpu_custom_call.1} parent=1 // pred_fallthru
      _
    // Predicated region
    $region26: #{tpu_custom_call.1} parent=1 // pred_check
      _
    $region27: #{tpu_custom_call.1} parent=1 // pred_check_branch
      %69 = sbr.rel (0) target = $region29
    $region28: #{tpu_custom_call.1} parent=1 // pred_region
      _
    $region29: #{tpu_custom_call.1} parent=1 // pred_fallthru
      _
    // Predicated region
    $region30: #{tpu_custom_call.1} parent=1 // pred_check
      _
    $region31: #{tpu_custom_call.1} parent=1 // pred_check_branch
      %71 = sbr.rel (0) target = $region33
    $region32: #{tpu_custom_call.1} parent=1 // pred_region
      %72 = dma.done [#allocation3], 256
    $region33: #{tpu_custom_call.1} parent=1 // pred_fallthru
      _
    // Predicated region
    $region34: #{tpu_custom_call.1} parent=1 // pred_check
      _
    $region35: #{tpu_custom_call.1} parent=1 // pred_check_branch
      %74 = sbr.rel (0) target = $region37
    $region36: #{tpu_custom_call.1} parent=1 // pred_region
      %75 = dma.done [#allocation6], 512
    $region37: #{tpu_custom_call.1} parent=1 // pred_fallthru
      _
    // Predicated region
    $region38: #{tpu_custom_call.1} parent=1 // pred_check
      _
    $region39: #{tpu_custom_call.1} parent=1 // pred_check_branch
      %77 = sbr.rel (0) target = $region41
    $region40: #{tpu_custom_call.1} parent=1 // pred_region
      %78 = dma.done [#allocation6], 2048
    $region41: #{tpu_custom_call.1} parent=1 // pred_fallthru
      _
    // Predicated region
    $region42: #{tpu_custom_call.1} parent=1 // pred_check
      _
    $region43: #{tpu_custom_call.1} parent=1 // pred_check_branch
      %80 = sbr.rel (0) target = $region45
    $region44: #{tpu_custom_call.1} parent=1 // pred_region
      %81 = dma.done [#allocation9], 2048
    $region45: #{tpu_custom_call.1} parent=1 // pred_fallthru
      _
    %v83 = vld [vmem:[#allocation5] sm:$0xff]
    %v84 = vld [vmem:[#allocation5 + $0x8] sm:$0xff]
    %v85 = vld [vmem:[#allocation5 + $0x10] sm:$0xff]
    %v86 = vld [vmem:[#allocation5 + $0x18] sm:$0xff]
    %v87 = vld [vmem:[#allocation2] sm:$0xff]
    %v88 = vld [vmem:[#allocation2 + $0x8] sm:$0xff]
    %v89 = vpack.c.bf16 %v88, %v87
    %v90 = vld [vmem:[%s2] sm:$0x3]
    %v92 = vlaneseq
    %v93 = vshrl.u32 %v92, 7
    %v94 = vsub.s32 0, %v93
    %v95 = vrot.slane %v90, %v94
    %v96 = vlaneseq
    %v97 = vshrl.u32 %v96, 7
    %v98 = vsub.s32 1, %v97
    %v99 = vrot.slane %v90, %v98
    %v106 = vunpack.c.l.b16 %v83
    %v107 = vunpack.c.h.b16 %v83
    %v108 = vunpack.c.l.b16 %v84
    %v109 = vunpack.c.h.b16 %v84
    %v110 = vunpack.c.l.b16 %v85
    %v111 = vunpack.c.h.b16 %v85
    %v112 = vunpack.c.l.b16 %v86
    %v113 = vunpack.c.h.b16 %v86
    %v114 = vpack.c.b16 %v108, %v106
    %v115 = vpack.c.b16 %v109, %v107
    %v116 = vpack.c.b16 %v112, %v110
    %v117 = vpack.c.b16 %v113, %v111
    %vm122 = vcmask 261120
    %v124 = vsel %vm122, %v89, 0
    %126 = vmatprep.subr.bf16.mxu0 %v115
    %127 = vmatpush1.bf16.msra.mxu0 %v114
    %128 = vmatprep.subr.bf16.mxu0 %v117
    %129 = vmatpush1.bf16.msra.mxu0 %v116
    %130 = vmatprep.subr.bf16.mxu0 0
    %131 = vmatpush1.bf16.msra.mxu0 0
    %132 = vmatprep.subr.bf16.mxu0 0
    %133 = vmatpush1.bf16.msra.mxu0 0
    %134 = vmatprep.subr.bf16.mxu0 0
    %135 = vmatpush1.bf16.msra.mxu0 0
    %136 = vmatprep.subr.bf16.mxu0 0
    %137 = vmatpush1.bf16.msra.mxu0 0
    %138 = vmatprep.subr.bf16.mxu0 0
    %139 = vmatpush1.bf16.msra.mxu0 0
    %140 = vmatprep.subr.bf16.mxu0 0
    %141 = vmatpush1.bf16.msra.mxu0 0
    %142 = vmatprep.subr.bf16.mxu0 0
    %143 = vmatpush1.bf16.msra.mxu0 0
    %144 = vmatprep.subr.bf16.mxu0 0
    %145 = vmatpush1.bf16.msra.mxu0 0
    %146 = vmatprep.subr.bf16.mxu0 0
    %147 = vmatpush1.bf16.msra.mxu0 0
    %148 = vmatprep.subr.bf16.mxu0 0
    %149 = vmatpush1.bf16.msra.mxu0 0
    %150 = vmatprep.subr.bf16.mxu0 0
    %151 = vmatpush1.bf16.msra.mxu0 0
    %152 = vmatprep.subr.bf16.mxu0 0
    %153 = vmatpush1.bf16.msra.mxu0 0
    %154 = vmatprep.subr.bf16.mxu0 0
    %155 = vmatpush1.bf16.msra.mxu0 0
    %156 = vmatprep.subr.bf16.mxu0 0
    %157 = vmatpush1.bf16.msra.mxu0 0
    %158 = vmatprep.mubr.bf16.mxu0 0
    %159 = vmatmul.mubr.bf16.gmra.mrb[0].mxu0 %v124
    %v160 = vpop.f32.mrb[0].mxu0
    %v161 = vadd.f32 %v95, %v160
    %v162 = vpop.f32.mrb[0].mxu0
    %v163 = vadd.f32 %v99, %v162
    %v164 = vpop.f32.mrb[0].mxu0
    %v165 = vadd.f32 %v95, %v164
    %v166 = vpop.f32.mrb[0].mxu0
    %v167 = vadd.f32 %v99, %v166
    %168 = vdwg.mxu0
    %v169 = vmax.f32 %v161, 0.0
    %v170 = vmax.f32 %v163, 0.0
    %v171 = vmax.f32 %v165, 0.0
    %v172 = vmax.f32 %v167, 0.0
    %v173 = vpack.c.bf16 %v171, %v169
    %v174 = vpack.c.bf16 %v172, %v170
    %v175 = vld [vmem:[#allocation7] sm:$0xff]
    %v176 = vld [vmem:[#allocation7 + $0x8] sm:$0xff]
    %v177 = vld [vmem:[#allocation7 + $0x10] sm:$0xff]
    %v178 = vld [vmem:[#allocation7 + $0x18] sm:$0xff]
    %v179 = vld [vmem:[#allocation7 + $0x20] sm:$0xff]
    %v180 = vld [vmem:[#allocation7 + $0x28] sm:$0xff]
    %v181 = vld [vmem:[#allocation7 + $0x30] sm:$0xff]
    %v182 = vld [vmem:[#allocation7 + $0x38] sm:$0xff]
    %v183 = vld [vmem:[#allocation7 + $0x40] sm:$0xff]
    %v184 = vld [vmem:[#allocation7 + $0x48] sm:$0xff]
    %v185 = vld [vmem:[#allocation7 + $0x50] sm:$0xff]
    %v186 = vld [vmem:[#allocation7 + $0x58] sm:$0xff]
    %v187 = vld [vmem:[#allocation7 + $0x60] sm:$0xff]
    %v188 = vld [vmem:[#allocation7 + $0x68] sm:$0xff]
    %v189 = vld [vmem:[#allocation7 + $0x70] sm:$0xff]
    %v190 = vld [vmem:[#allocation7 + $0x78] sm:$0xff]
    %v191 = vld [vmem:[%s4] sm:$0x3]
    %v193 = vlaneseq
    %v194 = vshrl.u32 %v193, 7
    %v195 = vsub.s32 0, %v194
    %v196 = vrot.slane %v191, %v195
    %v197 = vlaneseq
    %v198 = vshrl.u32 %v197, 7
    %v199 = vsub.s32 1, %v198
    %v200 = vrot.slane %v191, %v199
    %v219 = vunpack.c.l.b16 %v175
    %v220 = vunpack.c.h.b16 %v175
    %v221 = vunpack.c.l.b16 %v176
    %v222 = vunpack.c.h.b16 %v176
    %v223 = vunpack.c.l.b16 %v177
    %v224 = vunpack.c.h.b16 %v177
    %v225 = vunpack.c.l.b16 %v178
    %v226 = vunpack.c.h.b16 %v178
    %v227 = vunpack.c.l.b16 %v179
    %v228 = vunpack.c.h.b16 %v179
    %v229 = vunpack.c.l.b16 %v180
    %v230 = vunpack.c.h.b16 %v180
    %v231 = vunpack.c.l.b16 %v181
    %v232 = vunpack.c.h.b16 %v181
    %v233 = vunpack.c.l.b16 %v182
    %v234 = vunpack.c.h.b16 %v182
    %v235 = vunpack.c.l.b16 %v183
    %v236 = vunpack.c.h.b16 %v183
    %v237 = vunpack.c.l.b16 %v184
    %v238 = vunpack.c.h.b16 %v184
    %v239 = vunpack.c.l.b16 %v185
    %v240 = vunpack.c.h.b16 %v185
    %v241 = vunpack.c.l.b16 %v186
    %v242 = vunpack.c.h.b16 %v186
    %v243 = vunpack.c.l.b16 %v187
    %v244 = vunpack.c.h.b16 %v187
    %v245 = vunpack.c.l.b16 %v188
    %v246 = vunpack.c.h.b16 %v188
    %v247 = vunpack.c.l.b16 %v189
    %v248 = vunpack.c.h.b16 %v189
    %v249 = vunpack.c.l.b16 %v190
    %v250 = vunpack.c.h.b16 %v190
    %v251 = vpack.c.b16 %v221, %v219
    %v252 = vpack.c.b16 %v222, %v220
    %v253 = vpack.c.b16 %v225, %v223
    %v254 = vpack.c.b16 %v226, %v224
    %v255 = vpack.c.b16 %v229, %v227
    %v256 = vpack.c.b16 %v230, %v228
    %v257 = vpack.c.b16 %v233, %v231
    %v258 = vpack.c.b16 %v234, %v232
    %v259 = vpack.c.b16 %v237, %v235
    %v260 = vpack.c.b16 %v238, %v236
    %v261 = vpack.c.b16 %v241, %v239
    %v262 = vpack.c.b16 %v242, %v240
    %v263 = vpack.c.b16 %v245, %v243
    %v264 = vpack.c.b16 %v246, %v244
    %v265 = vpack.c.b16 %v249, %v247
    %v266 = vpack.c.b16 %v250, %v248
    %283 = vmatprep.subr.bf16.mxu0 %v252
    %284 = vmatpush1.bf16.msra.mxu0 %v251
    %285 = vmatprep.subr.bf16.mxu0 %v254
    %286 = vmatpush1.bf16.msra.mxu0 %v253
    %287 = vmatprep.subr.bf16.mxu0 %v256
    %288 = vmatpush1.bf16.msra.mxu0 %v255
    %289 = vmatprep.subr.bf16.mxu0 %v258
    %290 = vmatpush1.bf16.msra.mxu0 %v257
    %291 = vmatprep.subr.bf16.mxu0 %v260
    %292 = vmatpush1.bf16.msra.mxu0 %v259
    %293 = vmatprep.subr.bf16.mxu0 %v262
    %294 = vmatpush1.bf16.msra.mxu0 %v261
    %295 = vmatprep.subr.bf16.mxu0 %v264
    %296 = vmatpush1.bf16.msra.mxu0 %v263
    %297 = vmatprep.subr.bf16.mxu0 %v266
    %298 = vmatpush1.bf16.msra.mxu0 %v265
    %299 = vmatprep.subr.bf16.mxu0 0
    %300 = vmatpush1.bf16.msra.mxu0 0
    %301 = vmatprep.subr.bf16.mxu0 0
    %302 = vmatpush1.bf16.msra.mxu0 0
    %303 = vmatprep.subr.bf16.mxu0 0
    %304 = vmatpush1.bf16.msra.mxu0 0
    %305 = vmatprep.subr.bf16.mxu0 0
    %306 = vmatpush1.bf16.msra.mxu0 0
    %307 = vmatprep.subr.bf16.mxu0 0
    %308 = vmatpush1.bf16.msra.mxu0 0
    %309 = vmatprep.subr.bf16.mxu0 0
    %310 = vmatpush1.bf16.msra.mxu0 0
    %311 = vmatprep.subr.bf16.mxu0 0
    %312 = vmatpush1.bf16.msra.mxu0 0
    %313 = vmatprep.subr.bf16.mxu0 0
    %314 = vmatpush1.bf16.msra.mxu0 0
    %315 = vmatprep.mubr.bf16.mxu0 0
    %316 = vmatmul.mubr.bf16.gmra.mrb[0].mxu0 %v173
    %v317 = vpop.f32.mrb[0].mxu0
    %v318 = vadd.f32 %v196, %v317
    %v319 = vpop.f32.mrb[0].mxu0
    %v320 = vadd.f32 %v200, %v319
    %v321 = vpop.f32.mrb[0].mxu0
    %v322 = vadd.f32 %v196, %v321
    %v323 = vpop.f32.mrb[0].mxu0
    %v324 = vadd.f32 %v200, %v323
    %325 = vdwg.mxu0
    %v326 = vld [vmem:[#allocation8] sm:$0xff]
    %v327 = vld [vmem:[#allocation8 + $0x8] sm:$0xff]
    %v328 = vld [vmem:[#allocation8 + $0x10] sm:$0xff]
    %v329 = vld [vmem:[#allocation8 + $0x18] sm:$0xff]
    %v330 = vld [vmem:[#allocation8 + $0x20] sm:$0xff]
    %v331 = vld [vmem:[#allocation8 + $0x28] sm:$0xff]
    %v332 = vld [vmem:[#allocation8 + $0x30] sm:$0xff]
    %v333 = vld [vmem:[#allocation8 + $0x38] sm:$0xff]
    %v334 = vld [vmem:[#allocation8 + $0x40] sm:$0xff]
    %v335 = vld [vmem:[#allocation8 + $0x48] sm:$0xff]
    %v336 = vld [vmem:[#allocation8 + $0x50] sm:$0xff]
    %v337 = vld [vmem:[#allocation8 + $0x58] sm:$0xff]
    %v338 = vld [vmem:[#allocation8 + $0x60] sm:$0xff]
    %v339 = vld [vmem:[#allocation8 + $0x68] sm:$0xff]
    %v340 = vld [vmem:[#allocation8 + $0x70] sm:$0xff]
    %v341 = vld [vmem:[#allocation8 + $0x78] sm:$0xff]
    %v342 = vld [vmem:[%s6] sm:$0x3]
    %v344 = vlaneseq
    %v345 = vshrl.u32 %v344, 7
    %v346 = vsub.s32 0, %v345
    %v347 = vrot.slane %v342, %v346
    %v348 = vlaneseq
    %v349 = vshrl.u32 %v348, 7
    %v350 = vsub.s32 1, %v349
    %v351 = vrot.slane %v342, %v350
    %v370 = vunpack.c.l.b16 %v326
    %v371 = vunpack.c.h.b16 %v326
    %v372 = vunpack.c.l.b16 %v327
    %v373 = vunpack.c.h.b16 %v327
    %v374 = vunpack.c.l.b16 %v328
    %v375 = vunpack.c.h.b16 %v328
    %v376 = vunpack.c.l.b16 %v329
    %v377 = vunpack.c.h.b16 %v329
    %v378 = vunpack.c.l.b16 %v330
    %v379 = vunpack.c.h.b16 %v330
    %v380 = vunpack.c.l.b16 %v331
    %v381 = vunpack.c.h.b16 %v331
    %v382 = vunpack.c.l.b16 %v332
    %v383 = vunpack.c.h.b16 %v332
    %v384 = vunpack.c.l.b16 %v333
    %v385 = vunpack.c.h.b16 %v333
    %v386 = vunpack.c.l.b16 %v334
    %v387 = vunpack.c.h.b16 %v334
    %v388 = vunpack.c.l.b16 %v335
    %v389 = vunpack.c.h.b16 %v335
    %v390 = vunpack.c.l.b16 %v336
    %v391 = vunpack.c.h.b16 %v336
    %v392 = vunpack.c.l.b16 %v337
    %v393 = vunpack.c.h.b16 %v337
    %v394 = vunpack.c.l.b16 %v338
    %v395 = vunpack.c.h.b16 %v338
    %v396 = vunpack.c.l.b16 %v339
    %v397 = vunpack.c.h.b16 %v339
    %v398 = vunpack.c.l.b16 %v340
    %v399 = vunpack.c.h.b16 %v340
    %v400 = vunpack.c.l.b16 %v341
    %v401 = vunpack.c.h.b16 %v341
    %v402 = vpack.c.b16 %v372, %v370
    %v403 = vpack.c.b16 %v373, %v371
    %v404 = vpack.c.b16 %v376, %v374
    %v405 = vpack.c.b16 %v377, %v375
    %v406 = vpack.c.b16 %v380, %v378
    %v407 = vpack.c.b16 %v381, %v379
    %v408 = vpack.c.b16 %v384, %v382
    %v409 = vpack.c.b16 %v385, %v383
    %v410 = vpack.c.b16 %v388, %v386
    %v411 = vpack.c.b16 %v389, %v387
    %v412 = vpack.c.b16 %v392, %v390
    %v413 = vpack.c.b16 %v393, %v391
    %v414 = vpack.c.b16 %v396, %v394
    %v415 = vpack.c.b16 %v397, %v395
    %v416 = vpack.c.b16 %v400, %v398
    %v417 = vpack.c.b16 %v401, %v399
    %434 = vmatprep.subr.bf16.mxu0 %v403
    %435 = vmatpush1.bf16.msra.mxu0 %v402
    %436 = vmatprep.subr.bf16.mxu0 %v405
    %437 = vmatpush1.bf16.msra.mxu0 %v404
    %438 = vmatprep.subr.bf16.mxu0 %v407
    %439 = vmatpush1.bf16.msra.mxu0 %v406
    %440 = vmatprep.subr.bf16.mxu0 %v409
    %441 = vmatpush1.bf16.msra.mxu0 %v408
    %442 = vmatprep.subr.bf16.mxu0 %v411
    %443 = vmatpush1.bf16.msra.mxu0 %v410
    %444 = vmatprep.subr.bf16.mxu0 %v413
    %445 = vmatpush1.bf16.msra.mxu0 %v412
    %446 = vmatprep.subr.bf16.mxu0 %v415
    %447 = vmatpush1.bf16.msra.mxu0 %v414
    %448 = vmatprep.subr.bf16.mxu0 %v417
    %449 = vmatpush1.bf16.msra.mxu0 %v416
    %450 = vmatprep.subr.bf16.mxu0 0
    %451 = vmatpush1.bf16.msra.mxu0 0
    %452 = vmatprep.subr.bf16.mxu0 0
    %453 = vmatpush1.bf16.msra.mxu0 0
    %454 = vmatprep.subr.bf16.mxu0 0
    %455 = vmatpush1.bf16.msra.mxu0 0
    %456 = vmatprep.subr.bf16.mxu0 0
    %457 = vmatpush1.bf16.msra.mxu0 0
    %458 = vmatprep.subr.bf16.mxu0 0
    %459 = vmatpush1.bf16.msra.mxu0 0
    %460 = vmatprep.subr.bf16.mxu0 0
    %461 = vmatpush1.bf16.msra.mxu0 0
    %462 = vmatprep.subr.bf16.mxu0 0
    %463 = vmatpush1.bf16.msra.mxu0 0
    %464 = vmatprep.subr.bf16.mxu0 0
    %465 = vmatpush1.bf16.msra.mxu0 0
    %466 = vmatprep.mubr.bf16.mxu0 0
    %467 = vmatmul.mubr.bf16.gmra.mrb[0].mxu0 %v174
    %v468 = vpop.f32.mrb[0].mxu0
    %v469 = vadd.f32 %v347, %v468
    %v470 = vpop.f32.mrb[0].mxu0
    %v471 = vadd.f32 %v351, %v470
    %v472 = vpop.f32.mrb[0].mxu0
    %v473 = vadd.f32 %v347, %v472
    %v474 = vpop.f32.mrb[0].mxu0
    %v475 = vadd.f32 %v351, %v474
    %476 = vdwg.mxu0
    %v477 = vmul.f32 %v318, %v469
    %v478 = vmul.f32 %v320, %v471
    %v479 = vmul.f32 %v322, %v473
    %v480 = vmul.f32 %v324, %v475
    %481 = vst [vmem:[#allocation10] sm:$0xff] %v477
    %482 = vst [vmem:[#allocation10 + $0x8] sm:$0xff] %v478
    %483 = vst [vmem:[#allocation10 + $0x10] sm:$0xff] %v479
    %484 = vst [vmem:[#allocation10 + $0x18] sm:$0xff] %v480
    // Predicated region
    $region46: #{tpu_custom_call.1} parent=1 // pred_check
      _
    $region47: #{tpu_custom_call.1} parent=1 // pred_check_branch
      %486 = sbr.rel (0) target = $region49
    $region48: #{tpu_custom_call.1} parent=1 // pred_region
      %s488 = ssub.s32 512, 512
      %489 = vsyncadd [#allocation4], %s488
      %s490 = sshll.u32 [#allocation10], 4
      %s491 = int_to_ptr.vmem [resolvable:$true] %s490
      %496 = dma.vmem_to_hbm [thread:$0]  %s491, 512, %s7, [#allocation4], 256, 256, 16
    $region49: #{tpu_custom_call.1} parent=1 // pred_fallthru
      _
    // Predicated region
    $region50: #{tpu_custom_call.1} parent=1 // pred_check
      _
    $region51: #{tpu_custom_call.1} parent=1 // pred_check_branch
      %498 = sbr.rel (0) target = $region53
    $region52: #{tpu_custom_call.1} parent=1 // pred_region
      %499 = dma.done [#allocation4], 512
    $region53: #{tpu_custom_call.1} parent=1 // pred_fallthru
      _
    %500 = vsyncpa [#allocation3], 1
    %501 = vsyncpa [#allocation6], 1
    %502 = vsyncpa [#allocation9], 1
    %503 = vsyncpa [#allocation4], 1

</llo_original>
